<compile_context>
chip_gen: v6e
topology: v6e:2x2x1
jax: 0.10.0
libtpu: 0.0.40
codegen_flags: <defaults>
</compile_context>

<pallas_src>
import math

import jax
import jax.numpy as jnp
from jax.experimental import pallas as pl
from jax.experimental.pallas import tpu as pltpu

EMB_DIM = 24          # nn.Embedding(input_size, 24)
ATT_DIM = 16          # q/k/v project 24 -> 16
SCALE = 1.0 / math.sqrt(ATT_DIM)
LANE = 128
SUBLANE = 8
_NEG_BIG = -1e30      # additive mask bias; exp() underflows to exactly 0


def _decoder_kernel(x_ref, wqkv_ref, wo_ref, bo_ref, mask_ref, out_ref):
    """One grid step: `bb` sequences of the batch.

    x_ref   : (bb*T, D)      embedded tokens, rows = (batch, time) flattened
    wqkv_ref: (D, 3*ATT_DIM) fused q/k/v projection
    wo_ref  : (ATT_DIM, A_pad) output head, padded to a 128-lane multiple
    bo_ref  : (1, A_pad)
    mask_ref: (T, T)         additive causal mask bias (0 / -1e30), constant
    out_ref : (bb*T, A_pad)  lane/sublane-dense output slab
    """
    T = mask_ref.shape[0]
    rows = x_ref.shape[0]
    bb = rows // T
    cdt = x_ref.dtype                          # matmul operand dtype (f32 or bf16)

    x = x_ref[...]                                                   # (bb*T, D)

    # Fused QKV projection: one (bb*T, D) @ (D, 48) MXU matmul, f32 accumulate.
    qkv = jax.lax.dot_general(
        x, wqkv_ref[...], (((1,), (0,)), ((), ())),
        preferred_element_type=jnp.float32)                          # (bb*T, 48)

    q = qkv[:, 0 * ATT_DIM:1 * ATT_DIM].reshape(bb, T, ATT_DIM)
    k = qkv[:, 1 * ATT_DIM:2 * ATT_DIM].reshape(bb, T, ATT_DIM)
    v = qkv[:, 2 * ATT_DIM:3 * ATT_DIM].reshape(bb, T, ATT_DIM)

    # Scores in NT form (contract last dims, batch over sequences): no k.T.
    att = jax.lax.dot_general(
        q.astype(cdt), k.astype(cdt),
        (((2,), (2,)), ((0,), (0,))),
        preferred_element_type=jnp.float32)                          # (bb, T, T)
    att = att * SCALE + mask_ref[...][None, :, :]

    # Numerically stable softmax; reciprocal goes to the (otherwise idle) EUP.
    m = jnp.max(att, axis=-1, keepdims=True)
    p = jnp.exp(att - m)
    denom = jnp.sum(p, axis=-1, keepdims=True)
    p = p * pl.reciprocal(denom, approx=True)

    values = jax.lax.dot_general(
        p.astype(cdt), v.astype(cdt),
        (((2,), (1,)), ((0,), (0,))),
        preferred_element_type=jnp.float32)                          # (bb, T, 16)

    # Output head on a dense 2-D slab -> lane-dense (bb*T, A_pad) store.
    values2 = values.reshape(bb * T, ATT_DIM)
    out = jax.lax.dot_general(
        values2.astype(cdt), wo_ref[...], (((1,), (0,)), ((), ())),
        preferred_element_type=jnp.float32)                          # (bb*T, A_pad)
    out_ref[...] = (out + bo_ref[...]).astype(out_ref.dtype)


def _choose_block_batch(batch, seq, dim, target_block_bytes=512 * 1024):
    """Sequences per grid step.

    Big enough that the input block is ~0.5 MiB (amortizes the ~0.35us/step
    pipeline overhead and fills sublanes), but keep >= 2 grid steps when the
    batch allows so both v7x TensorCores get work via the 'parallel' axis.
    """
    per_seq_bytes = seq * dim * 4
    bb = max(1, target_block_bytes // per_seq_bytes)
    if batch >= 2:
        bb = min(bb, max(1, batch // 2))
    return int(min(bb, batch))


def sequence_decoder(tokens, params, *, block_batch=None, use_bf16_matmul=False):
    """tokens: (B, T) int32. Returns (B, T, action_space) float32.

    NOTE: at toy shapes (B=2, T=8) the XLA-fused reference matches/beats any
    custom kernel; this Pallas path is structured to win once B is large
    (hundreds+ of sequences per grid step).
    """
    emb = params["embedding"]                # (V, 24)
    wq, wk, wv = params["wq"], params["wk"], params["wv"]
    wo, bo = params["wo"], params["bo"]      # (16, A), (1, A)

    # ---- plain-JAX glue: gather, weight fusion, padding ---------------------
    x = emb[tokens].astype(jnp.float32)      # (B, T, D) embedding lookup
    B, T, D = x.shape
    A = wo.shape[1]

    # Fuse q/k/v into one projection -> single MXU matmul in-kernel.
    wqkv = jnp.concatenate([wq, wk, wv], axis=1)                 # (D, 48)

    # Lane-dense output: pad head width to a multiple of 128 lanes.
    A_pad = pl.cdiv(A, LANE) * LANE
    wo_p = jnp.zeros((ATT_DIM, A_pad), jnp.float32).at[:, :A].set(wo)
    bo_p = jnp.zeros((1, A_pad), jnp.float32).at[:, :A].set(bo)

    # Pad T to a sublane multiple. Padded key columns are strictly "future"
    # positions for every real query row, so the causal mask already hides them.
    T_pad = pl.cdiv(T, SUBLANE) * SUBLANE
    if T_pad != T:
        x = jnp.pad(x, ((0, 0), (0, T_pad - T), (0, 0)))

    # Causal-mask bias built once at trace time (folds to a constant), not
    # rebuilt with iota/compare on every grid step.
    tri = jnp.tril(jnp.ones((T_pad, T_pad), jnp.float32))
    mask_bias = jnp.where(tri > 0, 0.0, _NEG_BIG).astype(jnp.float32)

    # Pack many sequences per grid step; pad B so the grid tiles evenly.
    bb = _choose_block_batch(B, T_pad, D) if block_batch is None else block_batch
    n_blocks = pl.cdiv(B, bb)
    B_pad = n_blocks * bb
    if B_pad != B:
        x = jnp.pad(x, ((0, B_pad - B), (0, 0), (0, 0)))

    # Present activations as a lane/sublane-dense 2-D slab (rows = batch*time).
    x2 = x.reshape(B_pad * T_pad, D)
    if use_bf16_matmul:
        # v6e / v7x: MXU peak is bf16; accumulation stays f32 in-kernel.
        x2 = x2.astype(jnp.bfloat16)
        wqkv = wqkv.astype(jnp.bfloat16)
        wo_p = wo_p.astype(jnp.bfloat16)

    rows = bb * T_pad
    out2 = pl.pallas_call(
        _decoder_kernel,
        out_shape=jax.ShapeDtypeStruct((B_pad * T_pad, A_pad), jnp.float32),
        grid_spec=pltpu.PrefetchScalarGridSpec(
            num_scalar_prefetch=0,
            grid=(n_blocks,),
            in_specs=[
                pl.BlockSpec((rows, D), lambda b: (b, 0)),
                pl.BlockSpec((D, 3 * ATT_DIM), lambda b: (0, 0)),
                pl.BlockSpec((ATT_DIM, A_pad), lambda b: (0, 0)),
                pl.BlockSpec((1, A_pad), lambda b: (0, 0)),
                pl.BlockSpec((T_pad, T_pad), lambda b: (0, 0)),
            ],
            out_specs=pl.BlockSpec((rows, A_pad), lambda b: (b, 0)),
        ),
        compiler_params=pltpu.CompilerParams(
            dimension_semantics=("parallel",)),
    )(x2, wqkv, wo_p, bo_p, mask_bias)

    out = out2.reshape(B_pad, T_pad, A_pad)
    return out[:B, :T, :A]


def init_params(key, input_size, action_space):
    """Deterministic synthetic init (shapes mirror the PyTorch module)."""
    k_emb, k_q, k_k, k_v, k_o, k_b = jax.random.split(key, 6)
    # nn.Linear stores weight as (out, in); we store the transposed (in, out)
    # form so the kernel computes x @ W directly.
    lim_attn = 1.0 / math.sqrt(EMB_DIM)
    lim_out = 1.0 / math.sqrt(ATT_DIM)
    return {
        "embedding": jax.random.normal(k_emb, (input_size, EMB_DIM), jnp.float32),
        "wq": jax.random.uniform(k_q, (EMB_DIM, ATT_DIM), jnp.float32,
                                 -lim_attn, lim_attn),
        "wk": jax.random.uniform(k_k, (EMB_DIM, ATT_DIM), jnp.float32,
                                 -lim_attn, lim_attn),
        "wv": jax.random.uniform(k_v, (EMB_DIM, ATT_DIM), jnp.float32,
                                 -lim_attn, lim_attn),
        "wo": jax.random.uniform(k_o, (ATT_DIM, action_space), jnp.float32,
                                 -lim_out, lim_out),
        "bo": jax.random.uniform(k_b, (1, action_space), jnp.float32,
                                 -lim_out, lim_out),
    }


def _reference(tokens, params):
    """Pure-JAX mirror of the PyTorch forward, for a sanity check."""
    x = params["embedding"][tokens]                              # (B, T, 24)
    q = x @ params["wq"]
    k = x @ params["wk"]
    v = x @ params["wv"]
    att = jnp.einsum("btd,bsd->bts", q, k) * SCALE
    T = att.shape[-1]
    mask = jnp.tril(jnp.ones((T, T), jnp.float32))
    att = jnp.where(mask == 0, -jnp.inf, att)
    att = jax.nn.softmax(att, axis=-1)
    values = jnp.einsum("bts,bsd->btd", att, v)
    return values @ params["wo"] + params["bo"][0]


if __name__ == "__main__":
    key = jax.random.PRNGKey(0)
    k_params, k_tok = jax.random.split(key)

    input_size = 32        # vocab size
    action_space = 6
    batch, seq = 2, 8

    params = init_params(k_params, input_size, action_space)
    tokens = jax.random.randint(k_tok, (batch, seq), 0, input_size, jnp.int32)

    out = sequence_decoder(tokens, params)
    out = jax.block_until_ready(out)

    ref = _reference(tokens, params)
    assert out.shape == (batch, seq, action_space)
    # Tolerance loosened slightly vs exact f32: the softmax normalization uses
    # the approximate EUP reciprocal (pl.reciprocal(approx=True)).
    assert jnp.allclose(out, ref, atol=5e-3, rtol=5e-3), "mismatch vs reference"

    print("KERNEL_OK")
</pallas_src>

<mosaic_0001>
module attributes {stable_mosaic.version = 11 : i64} {
  func.func @_decoder_kernel(%arg0: i32, %arg1: memref<8x24xf32, #tpu.memory_space<vmem>>, %arg2: memref<24x48xf32, #tpu.memory_space<vmem>>, %arg3: memref<16x128xf32, #tpu.memory_space<vmem>>, %arg4: memref<1x128xf32, #tpu.memory_space<vmem>>, %arg5: memref<8x8xf32, #tpu.memory_space<vmem>>, %arg6: memref<8x128xf32, #tpu.memory_space<vmem>>) attributes {dimension_semantics = [#tpu.dimension_semantics<parallel>], iteration_bounds = array<i64: 2>, scalar_prefetch = 0 : i64, scratch_operands = 0 : i64, tpu.core_type = #tpu.core_type<tc>, window_params = [{transform_indices = @transform_0, window_bounds = array<i64: 8, 24>}, {pipeline_mode = #tpu.pipeline_mode<synchronous>, transform_indices = @transform_1, window_bounds = array<i64: 24, 48>}, {pipeline_mode = #tpu.pipeline_mode<synchronous>, transform_indices = @transform_2, window_bounds = array<i64: 16, 128>}, {pipeline_mode = #tpu.pipeline_mode<synchronous>, transform_indices = @transform_3, window_bounds = array<i64: 1, 128>}, {pipeline_mode = #tpu.pipeline_mode<synchronous>, transform_indices = @transform_4, window_bounds = array<i64: 8, 8>}, {transform_indices = @transform_5, window_bounds = array<i64: 8, 128>}]} {
    %c0 = arith.constant 0 : index
    %c0_0 = arith.constant 0 : index
    %0 = vector.load %arg1[%c0, %c0_0] : memref<8x24xf32, #tpu.memory_space<vmem>>, vector<8x24xf32>
    %c0_1 = arith.constant 0 : index
    %c0_2 = arith.constant 0 : index
    %1 = vector.load %arg2[%c0_1, %c0_2] : memref<24x48xf32, #tpu.memory_space<vmem>>, vector<24x48xf32>
    %cst = arith.constant dense<0.000000e+00> : vector<8x48xf32>
    %2 = tpu.matmul %0, %1, %cst {dimension_numbers = #tpu.dot_dimension_numbers<[1], [0], [0], [1], [0, 0, 1, 1], [], []>} : vector<8x24xf32>, vector<24x48xf32>, vector<8x48xf32> -> vector<8x48xf32>
    %3 = vector.extract_strided_slice %2 {offsets = [0, 0], sizes = [8, 16], strides = [1, 1]} : vector<8x48xf32> to vector<8x16xf32>
    %4 = vector.shape_cast %3 : vector<8x16xf32> to vector<1x8x16xf32>
    %5 = vector.extract_strided_slice %2 {offsets = [0, 16], sizes = [8, 16], strides = [1, 1]} : vector<8x48xf32> to vector<8x16xf32>
    %6 = vector.shape_cast %5 : vector<8x16xf32> to vector<1x8x16xf32>
    %7 = vector.extract_strided_slice %2 {offsets = [0, 32], sizes = [8, 16], strides = [1, 1]} : vector<8x48xf32> to vector<8x16xf32>
    %8 = vector.shape_cast %7 : vector<8x16xf32> to vector<1x8x16xf32>
    %cst_3 = arith.constant dense<0.000000e+00> : vector<1x8x8xf32>
    %9 = tpu.matmul %4, %6, %cst_3 {dimension_numbers = #tpu.dot_dimension_numbers<[2], [2], [1], [1], [0, 0, 0, 1, 1, 1], [0], [0]>} : vector<1x8x16xf32>, vector<1x8x16xf32>, vector<1x8x8xf32> -> vector<1x8x8xf32>
    %cst_4 = arith.constant 2.500000e-01 : f32
    %10 = vector.broadcast %cst_4 : f32 to vector<1x8x8xf32>
    %11 = arith.mulf %9, %10 : vector<1x8x8xf32>
    %c0_5 = arith.constant 0 : index
    %c0_6 = arith.constant 0 : index
    %12 = vector.load %arg5[%c0_5, %c0_6] : memref<8x8xf32, #tpu.memory_space<vmem>>, vector<8x8xf32>
    %13 = vector.shape_cast %12 : vector<8x8xf32> to vector<1x8x8xf32>
    %14 = arith.addf %11, %13 : vector<1x8x8xf32>
    %cst_7 = arith.constant dense<0xFF800000> : vector<1x8xf32>
    %15 = vector.multi_reduction <maximumf>, %14, %cst_7 [2] : vector<1x8x8xf32> to vector<1x8xf32>
    %16 = vector.shape_cast %15 : vector<1x8xf32> to vector<1x8x1xf32>
    %17 = vector.broadcast %16 : vector<1x8x1xf32> to vector<1x8x8xf32>
    %18 = arith.subf %14, %17 : vector<1x8x8xf32>
    %19 = math.exp %18 : vector<1x8x8xf32>
    %cst_8 = arith.constant dense<0.000000e+00> : vector<1x8xf32>
    %20 = vector.multi_reduction <add>, %19, %cst_8 [2] : vector<1x8x8xf32> to vector<1x8xf32>
    %21 = vector.shape_cast %20 : vector<1x8xf32> to vector<1x8x1xf32>
    %22 = tpu.reciprocal %21 {approx = true} : vector<1x8x1xf32> -> vector<1x8x1xf32>
    %23 = vector.broadcast %22 : vector<1x8x1xf32> to vector<1x8x8xf32>
    %24 = arith.mulf %19, %23 : vector<1x8x8xf32>
    %cst_9 = arith.constant dense<0.000000e+00> : vector<1x8x16xf32>
    %25 = tpu.matmul %24, %8, %cst_9 {dimension_numbers = #tpu.dot_dimension_numbers<[2], [1], [1], [2], [0, 0, 0, 1, 1, 2], [0], [0]>} : vector<1x8x8xf32>, vector<1x8x16xf32>, vector<1x8x16xf32> -> vector<1x8x16xf32>
    %26 = vector.shape_cast %25 : vector<1x8x16xf32> to vector<8x16xf32>
    %c0_10 = arith.constant 0 : index
    %c0_11 = arith.constant 0 : index
    %27 = vector.load %arg3[%c0_10, %c0_11] : memref<16x128xf32, #tpu.memory_space<vmem>>, vector<16x128xf32>
    %cst_12 = arith.constant dense<0.000000e+00> : vector<8x128xf32>
    %28 = tpu.matmul %26, %27, %cst_12 {dimension_numbers = #tpu.dot_dimension_numbers<[1], [0], [0], [1], [0, 0, 1, 1], [], []>} : vector<8x16xf32>, vector<16x128xf32>, vector<8x128xf32> -> vector<8x128xf32>
    %c0_13 = arith.constant 0 : index
    %c0_14 = arith.constant 0 : index
    %29 = vector.load %arg4[%c0_13, %c0_14] : memref<1x128xf32, #tpu.memory_space<vmem>>, vector<1x128xf32>
    %30 = vector.broadcast %29 : vector<1x128xf32> to vector<8x128xf32>
    %31 = arith.addf %28, %30 : vector<8x128xf32>
    %c0_15 = arith.constant 0 : index
    %c0_16 = arith.constant 0 : index
    %32 = vector.load %arg6[%c0_15, %c0_16] : memref<8x128xf32, #tpu.memory_space<vmem>>, vector<8x128xf32>
    tpu.vector_store %arg6[%c0_15, %c0_16], %31 {strides = array<i32>} : memref<8x128xf32, #tpu.memory_space<vmem>>, vector<8x128xf32>,
    return
  }
  func.func @transform_0(%arg0: i32) -> (i32, i32) {
    %c0_i32 = arith.constant 0 : i32
    %c0_i32_0 = arith.constant 0 : i32
    return %arg0, %c0_i32 : i32, i32
  }
  func.func @transform_1(%arg0: i32) -> (i32, i32) {
    %c0_i32 = arith.constant 0 : i32
    %c0_i32_0 = arith.constant 0 : i32
    %c0_i32_1 = arith.constant 0 : i32
    return %c0_i32, %c0_i32_0 : i32, i32
  }
  func.func @transform_2(%arg0: i32) -> (i32, i32) {
    %c0_i32 = arith.constant 0 : i32
    %c0_i32_0 = arith.constant 0 : i32
    %c0_i32_1 = arith.constant 0 : i32
    return %c0_i32, %c0_i32_0 : i32, i32
  }
  func.func @transform_3(%arg0: i32) -> (i32, i32) {
    %c0_i32 = arith.constant 0 : i32
    %c0_i32_0 = arith.constant 0 : i32
    %c0_i32_1 = arith.constant 0 : i32
    return %c0_i32, %c0_i32_0 : i32, i32
  }
  func.func @transform_4(%arg0: i32) -> (i32, i32) {
    %c0_i32 = arith.constant 0 : i32
    %c0_i32_0 = arith.constant 0 : i32
    %c0_i32_1 = arith.constant 0 : i32
    return %c0_i32, %c0_i32_0 : i32, i32
  }
  func.func @transform_5(%arg0: i32) -> (i32, i32) {
    %c0_i32 = arith.constant 0 : i32
    %c0_i32_0 = arith.constant 0 : i32
    return %arg0, %c0_i32 : i32, i32
  }
}

</mosaic_0001>

<llo_original>
// kernel: tpu_custom_call.1
$region0: #{tpu_custom_call.1}
  #allocation0 [shape = 'u32[]', space=smem, size = 0x4, offset = 0x4, fixed_abs, tag = 'smem constant byte address 0x4 - core index']
  #allocation1 [shape = 'u32[144,128]{1,0:T(1,128)}', space=vmem, size = 0x12000, scoped, tag = 'internal scratch']
  %s0 = inlined_call_operand.hbm [shape: f32[16,24], index: 0, kind: input, shape index: {}]
  %s1 = inlined_call_operand.hbm [shape: f32[24,48], index: 1, kind: input, shape index: {}]
  %s2 = inlined_call_operand.hbm [shape: f32[16,128], index: 2, kind: input, shape index: {}]
  %s3 = inlined_call_operand.vmem [shape: f32[1,128], index: 3, kind: input, shape index: {}]
  %s4 = inlined_call_operand.hbm [shape: f32[8,8], index: 4, kind: input, shape index: {}]
  %s5 = inlined_call_operand.hbm [shape: f32[16,128], index: 5, kind: output, shape index: {}]
  %s6 = sld [smem:[#allocation0]]
  $region69: #{tpu_custom_call.1} parent=0
    _
  %s8 = ssub.s32 1, %s6
  %s9 = scalar_select 0, %s8, %s6
  $region1: #{tpu_custom_call.1} parent=0
    #allocation2 [shape = 'u8[8192]{0}', space=vmem, size = 0x2000, scoped, tag = 'input window, operand 0']
    #allocation3 [shape = 's32[2]{0}', space=sflag, size = 0x8, scoped, tag = 'scoped memory for tpu_custom_call.1']
    #allocation4 [shape = 's32[2]{0}', space=sflag, size = 0x8, scoped, tag = 'scoped memory for tpu_custom_call.1']
    #allocation5 [shape = 'u8[12288]{0}', space=vmem, size = 0x3000, scoped, tag = 'input window, operand 1, single buffered']
    #allocation6 [shape = 's32[1]{0}', space=sflag, size = 0x4, scoped, tag = 'scoped memory for tpu_custom_call.1']
    #allocation7 [shape = 'u8[8192]{0}', space=vmem, size = 0x2000, scoped, tag = 'input window, operand 2, single buffered']
    #allocation8 [shape = 'u8[4096]{0}', space=vmem, size = 0x1000, scoped, tag = 'input window, operand 4, single buffered']
    #allocation9 [shape = 's32[1]{0}', space=sflag, size = 0x4, scoped, tag = 'scoped memory for tpu_custom_call.1']
    #allocation10 [shape = 'u8[8192]{0}', space=vmem, size = 0x2000, scoped, tag = 'output window, operand 0']
    %10 = vsyncpa [#allocation3], 0
    %s11 = scalar_lea.sflag [#allocation3], 1
    %12 = vsyncpa %s11, 0
    %13 = vsyncpa [#allocation6], 0
    %14 = vsyncpa [#allocation9], 0
    %15 = vsyncpa [#allocation4], 0
    %s16 = scalar_lea.sflag [#allocation4], 1
    %17 = vsyncpa %s16, 0
    loop: start=0, step=1, limit=4
    $region2: #{tpu_custom_call.1} parent=1 // loop_pre_header
      _
    $region3: #{tpu_custom_call.1} parent=1 // loop_header
      %s19 = sphi 0, %s23
      %p20 = scmp.ge.s32.totalorder %s19, 4
      %s29 = sphi 0, %s31
      %s32 = sphi 0, %s29
      %s33 = sphi 0, %s32
      %s49 = sphi 0, %s33
      %s53 = sphi 0, %s53
      %s55 = sphi 0, %s53
      %s56 = sphi 0, %s55
      %s70 = sphi 0, %s56
      %s74 = sphi 0, %s74
      %s76 = sphi 0, %s74
      %s77 = sphi 0, %s76
      %s91 = sphi 0, %s77
      %s95 = sphi 0, %s95
      %s97 = sphi 0, %s95
      %s98 = sphi 0, %s97
      %s112 = sphi 0, %s98
      %s116 = sphi 0, %s116
      %s118 = sphi 0, %s116
      %s119 = sphi 0, %s118
      %s133 = sphi 0, %s119
      %s139 = sphi 0, %s141
      %s142 = sphi 0, %s139
      %s143 = sphi 0, %s142
      %s159 = sphi 0, %s143
    $region4: #{tpu_custom_call.1} parent=1 // loop_header_branch
      %22 = sbr.rel (%p20) target = $region8
    $region5: #{tpu_custom_call.1} parent=1 // loop_body
      %s24 = ssub.s32 %s19, 1
      %s25 = ssub.s32 %s19, 2
      %s26 = sadd.s32 %s19, 1
      %s27 = ssub.s32 %s19, %s26
      %p28 = scmp.eq.s32.totalorder %s27, 0
      %s30 = sadd.s32 %s29, 1
      %s31 = scalar_select %p28, %s29, %s30
      %p34 = pneg %p28
      %p35 = scmp.eq.s32.totalorder %s19, 1
      %p36 = por %p34, %p35
      %p37 = scmp.ne.s32.totalorder %s29, %s32
      %p38 = scmp.eq.s32.totalorder %s19, 0
      %p39 = por %p37, %p38
      %p40 = scmp.ne.s32.totalorder %s29, %s32
      %p41 = scmp.eq.s32.totalorder %s24, 1
      %p42 = por %p40, %p41
      %p43 = scmp.ne.s32.totalorder %s32, %s33
      %p44 = scmp.eq.s32.totalorder %s24, 0
      %p45 = por %p43, %p44
      %p46 = scmp.ne.s32.totalorder %s32, %s33
      %p47 = scmp.eq.s32.totalorder %s25, 1
      %p48 = por %p46, %p47
      %p50 = scmp.ne.s32.totalorder %s33, %s49
      %p51 = scmp.eq.s32.totalorder %s25, 0
      %p52 = por %p50, %p51
      %s54 = sadd.s32 %s53, 1
      %p57 = scmp.eq.s32.totalorder %s19, 1
      %p58 = scmp.ne.s32.totalorder %s53, %s55
      %p59 = scmp.eq.s32.totalorder %s19, 0
      %p60 = por %p58, %p59
      %p61 = scmp.ne.s32.totalorder %s53, %s55
      %p62 = scmp.eq.s32.totalorder %s24, 1
      %p63 = por %p61, %p62
      %p64 = scmp.ne.s32.totalorder %s55, %s56
      %p65 = scmp.eq.s32.totalorder %s24, 0
      %p66 = por %p64, %p65
      %p67 = scmp.ne.s32.totalorder %s55, %s56
      %p68 = scmp.eq.s32.totalorder %s25, 1
      %p69 = por %p67, %p68
      %p71 = scmp.ne.s32.totalorder %s56, %s70
      %p72 = scmp.eq.s32.totalorder %s25, 0
      %p73 = por %p71, %p72
      %s75 = sadd.s32 %s74, 1
      %p78 = scmp.eq.s32.totalorder %s19, 1
      %p79 = scmp.ne.s32.totalorder %s74, %s76
      %p80 = scmp.eq.s32.totalorder %s19, 0
      %p81 = por %p79, %p80
      %p82 = scmp.ne.s32.totalorder %s74, %s76
      %p83 = scmp.eq.s32.totalorder %s24, 1
      %p84 = por %p82, %p83
      %p85 = scmp.ne.s32.totalorder %s76, %s77
      %p86 = scmp.eq.s32.totalorder %s24, 0
      %p87 = por %p85, %p86
      %p88 = scmp.ne.s32.totalorder %s76, %s77
      %p89 = scmp.eq.s32.totalorder %s25, 1
      %p90 = por %p88, %p89
      %p92 = scmp.ne.s32.totalorder %s77, %s91
      %p93 = scmp.eq.s32.totalorder %s25, 0
      %p94 = por %p92, %p93
      %s96 = sadd.s32 %s95, 1
      %p99 = scmp.eq.s32.totalorder %s19, 1
      %p100 = scmp.ne.s32.totalorder %s95, %s97
      %p101 = scmp.eq.s32.totalorder %s19, 0
      %p102 = por %p100, %p101
      %p103 = scmp.ne.s32.totalorder %s95, %s97
      %p104 = scmp.eq.s32.totalorder %s24, 1
      %p105 = por %p103, %p104
      %p106 = scmp.ne.s32.totalorder %s97, %s98
      %p107 = scmp.eq.s32.totalorder %s24, 0
      %p108 = por %p106, %p107
      %p109 = scmp.ne.s32.totalorder %s97, %s98
      %p110 = scmp.eq.s32.totalorder %s25, 1
      %p111 = por %p109, %p110
      %p113 = scmp.ne.s32.totalorder %s98, %s112
      %p114 = scmp.eq.s32.totalorder %s25, 0
      %p115 = por %p113, %p114
      %s117 = sadd.s32 %s116, 1
      %p120 = scmp.eq.s32.totalorder %s19, 1
      %p121 = scmp.ne.s32.totalorder %s116, %s118
      %p122 = scmp.eq.s32.totalorder %s19, 0
      %p123 = por %p121, %p122
      %p124 = scmp.ne.s32.totalorder %s116, %s118
      %p125 = scmp.eq.s32.totalorder %s24, 1
      %p126 = por %p124, %p125
      %p127 = scmp.ne.s32.totalorder %s118, %s119
      %p128 = scmp.eq.s32.totalorder %s24, 0
      %p129 = por %p127, %p128
      %p130 = scmp.ne.s32.totalorder %s118, %s119
      %p131 = scmp.eq.s32.totalorder %s25, 1
      %p132 = por %p130, %p131
      %p134 = scmp.ne.s32.totalorder %s119, %s133
      %p135 = scmp.eq.s32.totalorder %s25, 0
      %p136 = por %p134, %p135
      %s137 = ssub.s32 %s19, %s26
      %p138 = scmp.eq.s32.totalorder %s137, 0
      %s140 = sadd.s32 %s139, 1
      %s141 = scalar_select %p138, %s139, %s140
      %p144 = pneg %p138
      %p145 = scmp.eq.s32.totalorder %s19, 1
      %p146 = por %p144, %p145
      %p147 = scmp.ne.s32.totalorder %s139, %s142
      %p148 = scmp.eq.s32.totalorder %s19, 0
      %p149 = por %p147, %p148
      %p150 = scmp.ne.s32.totalorder %s139, %s142
      %p151 = scmp.eq.s32.totalorder %s24, 1
      %p152 = por %p150, %p151
      %p153 = scmp.ne.s32.totalorder %s142, %s143
      %p154 = scmp.eq.s32.totalorder %s24, 0
      %p155 = por %p153, %p154
      %p156 = scmp.ne.s32.totalorder %s142, %s143
      %p157 = scmp.eq.s32.totalorder %s25, 1
      %p158 = por %p156, %p157
      %p160 = scmp.ne.s32.totalorder %s143, %s159
      %p161 = scmp.eq.s32.totalorder %s25, 0
      %p162 = por %p160, %p161
      %p163 = scmp.le.s32.totalorder 1, %s19
      %p164 = scmp.lt.s32.totalorder %s19, 3
      %p165 = pnand %p163, %p164
      %p166 = pneg %p165
      // Predicated region
      $region9: #{tpu_custom_call.1} parent=5 // pred_check
        _
      $region10: #{tpu_custom_call.1} parent=5 // pred_check_branch
        %168 = sbr.rel (%p165) target = $region12
      $region11: #{tpu_custom_call.1} parent=5 // pred_region
        %s169 = ssub.s32 %s19, 1
        // Predicated region
        $region13: #{tpu_custom_call.1} parent=11 // pred_check
          %p170 = pneg %p66
        $region14: #{tpu_custom_call.1} parent=11 // pred_check_branch
          %172 = sbr.rel (%p170) target = $region16
        $region15: #{tpu_custom_call.1} parent=11 // pred_region
          %s174 = ssub.s32 384, 384
          %175 = vsyncadd [#allocation6], %s174
          %s176 = sshll.u32 [#allocation5], 4
          %s177 = int_to_ptr.vmem [resolvable:$true] %s176
          %182 = dma.hbm_to_vmem [thread:$0]  %s1, 384, %s177, [#allocation6], 128, 128, 8
        $region16: #{tpu_custom_call.1} parent=11 // pred_fallthru
          _
        // Predicated region
        $region17: #{tpu_custom_call.1} parent=11 // pred_check
          %p183 = pneg %p87
        $region18: #{tpu_custom_call.1} parent=11 // pred_check_branch
          %185 = sbr.rel (%p183) target = $region20
        $region19: #{tpu_custom_call.1} parent=11 // pred_region
          %s187 = ssub.s32 256, 256
          %188 = vsyncadd [#allocation6], %s187
          %s189 = sshll.u32 [#allocation7], 4
          %s190 = int_to_ptr.vmem [resolvable:$true] %s189
          %195 = dma.hbm_to_vmem [thread:$0]  %s2, 256, %s190, [#allocation6], 128, 128, 8
        $region20: #{tpu_custom_call.1} parent=11 // pred_fallthru
          _
        // Predicated region
        $region21: #{tpu_custom_call.1} parent=11 // pred_check
          %p196 = pneg %p108
        $region22: #{tpu_custom_call.1} parent=11 // pred_check_branch
          %198 = sbr.rel (%p196) target = $region24
        $region23: #{tpu_custom_call.1} parent=11 // pred_region
          _
        $region24: #{tpu_custom_call.1} parent=11 // pred_fallthru
          _
        // Predicated region
        $region25: #{tpu_custom_call.1} parent=11 // pred_check
          %p199 = pneg %p129
        $region26: #{tpu_custom_call.1} parent=11 // pred_check_branch
          %201 = sbr.rel (%p199) target = $region28
        $region27: #{tpu_custom_call.1} parent=11 // pred_region
          %s203 = ssub.s32 128, 128
          %204 = vsyncadd [#allocation9], %s203
          %s206 = sshll.u32 [#allocation8], 4
          %s207 = int_to_ptr.vmem [resolvable:$true] %s206
          %209 = dma.hbm_to_vmem [thread:$0]  %s4, 128, %s207, [#allocation9]
        $region28: #{tpu_custom_call.1} parent=11 // pred_fallthru
          _
      $region12: #{tpu_custom_call.1} parent=5 // pred_fallthru
        _
      %p210 = scmp.lt.s32.totalorder %s19, 2
      // Predicated region
      $region29: #{tpu_custom_call.1} parent=5 // pred_check
        %p211 = pneg %p210
      $region30: #{tpu_custom_call.1} parent=5 // pred_check_branch
        %213 = sbr.rel (%p211) target = $region32
      $region31: #{tpu_custom_call.1} parent=5 // pred_region
        // Predicated region
        $region33: #{tpu_custom_call.1} parent=31 // pred_check
          %p214 = pneg %p39
        $region34: #{tpu_custom_call.1} parent=31 // pred_check_branch
          %216 = sbr.rel (%p214) target = $region36
        $region35: #{tpu_custom_call.1} parent=31 // pred_region
          %s217 = sand.u32 %s29, 1
          %s218 = scalar_lea.sflag [#allocation3], %s217
          %s219 = sand.u32 %s29, 1
          %s220 = smul.addr %s219, 8
          %s221 = scalar_lea.vmem [#allocation2], %s220
          %s223 = ssub.s32 128, 128
          %224 = vsyncadd %s218, %s223
          %s225 = smul.addr %s19, 128
          %s226 = scalar_lea.hbm %s0, %s225
          %s228 = sshll.u32 %s221, 4
          %s229 = int_to_ptr.vmem [resolvable:$true] %s228
          %231 = dma.hbm_to_vmem [thread:$0]  %s226, 128, %s229, %s218
        $region36: #{tpu_custom_call.1} parent=31 // pred_fallthru
          _
      $region32: #{tpu_custom_call.1} parent=5 // pred_fallthru
        _
      %p232 = scmp.le.s32.totalorder 1, %s19
      %p233 = scmp.lt.s32.totalorder %s19, 3
      %p234 = pnand %p232, %p233
      %p235 = pneg %p234
      // Predicated region
      $region37: #{tpu_custom_call.1} parent=5 // pred_check
        _
      $region38: #{tpu_custom_call.1} parent=5 // pred_check_branch
        %237 = sbr.rel (%p234) target = $region40
      $region39: #{tpu_custom_call.1} parent=5 // pred_region
        %s238 = ssub.s32 %s19, 1
        %s239 = sand.u32 %s32, 1
        %s240 = scalar_lea.sflag [#allocation3], %s239
        %s241 = sand.u32 %s32, 1
        %s242 = smul.addr %s241, 8
        %s243 = scalar_lea.vmem [#allocation2], %s242
        // Predicated region
        $region41: #{tpu_custom_call.1} parent=39 // pred_check
          %p244 = pneg %p45
        $region42: #{tpu_custom_call.1} parent=39 // pred_check_branch
          %246 = sbr.rel (%p244) target = $region44
        $region43: #{tpu_custom_call.1} parent=39 // pred_region
          %247 = dma.done %s240, 128
        $region44: #{tpu_custom_call.1} parent=39 // pred_fallthru
          _
        // Predicated region
        $region45: #{tpu_custom_call.1} parent=39 // pred_check
          %p248 = pneg %p66
        $region46: #{tpu_custom_call.1} parent=39 // pred_check_branch
          %250 = sbr.rel (%p248) target = $region48
        $region47: #{tpu_custom_call.1} parent=39 // pred_region
          %251 = dma.done [#allocation6], 384
        $region48: #{tpu_custom_call.1} parent=39 // pred_fallthru
          _
        // Predicated region
        $region49: #{tpu_custom_call.1} parent=39 // pred_check
          %p252 = pneg %p87
        $region50: #{tpu_custom_call.1} parent=39 // pred_check_branch
          %254 = sbr.rel (%p252) target = $region52
        $region51: #{tpu_custom_call.1} parent=39 // pred_region
          %255 = dma.done [#allocation6], 256
        $region52: #{tpu_custom_call.1} parent=39 // pred_fallthru
          _
        // Predicated region
        $region53: #{tpu_custom_call.1} parent=39 // pred_check
          %p256 = pneg %p129
        $region54: #{tpu_custom_call.1} parent=39 // pred_check_branch
          %258 = sbr.rel (%p256) target = $region56
        $region55: #{tpu_custom_call.1} parent=39 // pred_region
          %259 = dma.done [#allocation9], 128
        $region56: #{tpu_custom_call.1} parent=39 // pred_fallthru
          _
        %s260 = sand.u32 %s32, 1
        %s261 = scalar_lea.sflag [#allocation3], %s260
        %s262 = sand.u32 %s32, 1
        %s263 = smul.addr %s262, 8
        %s264 = scalar_lea.vmem [#allocation2], %s263
        %p265 = pneg %p45
        %p266 = pneg %p42
        %p267 = pneg %p66
        %p268 = pneg %p63
        %p269 = pneg %p87
        %p270 = pneg %p84
        %p271 = pneg %p108
        %p272 = pneg %p105
        %p273 = pneg %p129
        %p274 = pneg %p126
        %p275 = pneg %p155
        %p276 = pneg %p152
        %s277 = sand.u32 %s142, 1
        %s278 = scalar_lea.sflag [#allocation4], %s277
        %s279 = sand.u32 %s142, 1
        %s280 = smul.addr %s279, 8
        %s281 = scalar_lea.vmem [#allocation10], %s280
        %v282 = vld [vmem:[%s243] sm:$0xff]
        %v283 = vld [vmem:[#allocation5] sm:$0xff]
        %v284 = vld [vmem:[#allocation5 + $0x8] sm:$0xff]
        %v285 = vld [vmem:[#allocation5 + $0x10] sm:$0xff]
        %vm286 = vcmask 195584
        %v288 = vsel %vm286, %v282, 0
        %290 = vmatprep.subr.mxu0 0.0
        %291 = vmatpush1.msra.mxu0 0.0
        %292 = vmatprep.subr.mxu0 0.0
        %293 = vmatpush1.msra.mxu0 0.0
        %294 = vmatprep.subr.mxu0 0.0
        %295 = vmatpush1.msra.mxu0 0.0
        %296 = vmatprep.subr.mxu0 0.0
        %297 = vmatpush1.msra.mxu0 0.0
        %298 = vmatprep.subr.mxu0 0.0
        %299 = vmatpush1.msra.mxu0 0.0
        %300 = vmatprep.subr.mxu0 0.0
        %301 = vmatpush1.msra.mxu0 0.0
        %302 = vmatprep.subr.mxu0 0.0
        %303 = vmatpush1.msra.mxu0 0.0
        %304 = vmatprep.subr.mxu0 0.0
        %305 = vmatpush1.msra.mxu0 0.0
        %306 = vmatprep.subr.mxu0 0.0
        %307 = vmatpush1.msra.mxu0 0.0
        %308 = vmatprep.subr.mxu0 0.0
        %309 = vmatpush1.msra.mxu0 0.0
        %310 = vmatprep.subr.mxu0 0.0
        %311 = vmatpush1.msra.mxu0 0.0
        %312 = vmatprep.subr.mxu0 0.0
        %313 = vmatpush1.msra.mxu0 0.0
        %314 = vmatprep.subr.mxu0 0.0
        %315 = vmatpush1.msra.mxu0 0.0
        %316 = vmatprep.subr.mxu0 0.0
        %317 = vmatpush1.msra.mxu0 %v285
        %318 = vmatprep.subr.mxu0 0.0
        %319 = vmatpush1.msra.mxu0 %v284
        %320 = vmatprep.subr.mxu0 0.0
        %321 = vmatpush1.msra.mxu0 %v283
        %322 = vmatprep.subr.mxu0 0.0
        %323 = vmatpush2.msra.mxu0 0.0
        %324 = vmatprep.subr.mxu0 0.0
        %325 = vmatpush2.msra.mxu0 0.0
        %326 = vmatprep.subr.mxu0 0.0
        %327 = vmatpush2.msra.mxu0 0.0
        %328 = vmatprep.subr.mxu0 0.0
        %329 = vmatpush2.msra.mxu0 0.0
        %330 = vmatprep.subr.mxu0 0.0
        %331 = vmatpush2.msra.mxu0 0.0
        %332 = vmatprep.subr.mxu0 0.0
        %333 = vmatpush2.msra.mxu0 0.0
        %334 = vmatprep.subr.mxu0 0.0
        %335 = vmatpush2.msra.mxu0 0.0
        %336 = vmatprep.subr.mxu0 0.0
        %337 = vmatpush2.msra.mxu0 0.0
        %338 = vmatprep.subr.mxu0 0.0
        %339 = vmatpush2.msra.mxu0 0.0
        %340 = vmatprep.subr.mxu0 0.0
        %341 = vmatpush2.msra.mxu0 0.0
        %342 = vmatprep.subr.mxu0 0.0
        %343 = vmatpush2.msra.mxu0 0.0
        %344 = vmatprep.subr.mxu0 0.0
        %345 = vmatpush2.msra.mxu0 0.0
        %346 = vmatprep.subr.mxu0 0.0
        %347 = vmatpush2.msra.mxu0 0.0
        %348 = vmatprep.subr.mxu0 0.0
        %349 = vmatpush2.msra.mxu0 0.0
        %350 = vmatprep.subr.mxu0 0.0
        %351 = vmatpush2.msra.mxu0 0.0
        %352 = vmatprep.subr.mxu0 0.0
        %353 = vmatpush2.msra.mxu0 0.0
        %354 = vmatprep.mubr.f32.mxu0 0.0
        %355 = vmatmul.mubr.f32.gmra.mxu0 %v288
        %v356 = vpop.f32.mrf.mxu0
        %v357 = vadd.f32 0.0, %v356
        %v358 = vpop.f32.mrf.mxu0
        %359 = vdwg.mxu0
        %361 = vrot.lane.b32.xlu0 %v357, 112
        %v362 = vpop.permute.xlu0 %361
        %vm363 = vcmask 130048
        %v364 = vsel %vm363, %v357, 0
        %v366 = vsel %vm363, %v362, 0
        %368 = vmatprep.subr.mxu0 0.0
        %369 = vmatpush1.xpose.msra.mxu0 0.0
        %370 = vmatprep.subr.mxu0 0.0
        %371 = vmatpush1.xpose.msra.mxu0 0.0
        %372 = vmatprep.subr.mxu0 0.0
        %373 = vmatpush1.xpose.msra.mxu0 0.0
        %374 = vmatprep.subr.mxu0 0.0
        %375 = vmatpush1.xpose.msra.mxu0 0.0
        %376 = vmatprep.subr.mxu0 0.0
        %377 = vmatpush1.xpose.msra.mxu0 0.0
        %378 = vmatprep.subr.mxu0 0.0
        %379 = vmatpush1.xpose.msra.mxu0 0.0
        %380 = vmatprep.subr.mxu0 0.0
        %381 = vmatpush1.xpose.msra.mxu0 0.0
        %382 = vmatprep.subr.mxu0 0.0
        %383 = vmatpush1.xpose.msra.mxu0 0.0
        %384 = vmatprep.subr.mxu0 0.0
        %385 = vmatpush1.xpose.msra.mxu0 0.0
        %386 = vmatprep.subr.mxu0 0.0
        %387 = vmatpush1.xpose.msra.mxu0 0.0
        %388 = vmatprep.subr.mxu0 0.0
        %389 = vmatpush1.xpose.msra.mxu0 0.0
        %390 = vmatprep.subr.mxu0 0.0
        %391 = vmatpush1.xpose.msra.mxu0 0.0
        %392 = vmatprep.subr.mxu0 0.0
        %393 = vmatpush1.xpose.msra.mxu0 0.0
        %394 = vmatprep.subr.mxu0 0.0
        %395 = vmatpush1.xpose.msra.mxu0 0.0
        %396 = vmatprep.subr.mxu0 0.0
        %397 = vmatpush1.xpose.msra.mxu0 0.0
        %398 = vmatprep.subr.mxu0 0.0
        %399 = vmatpush1.xpose.msra.mxu0 %v366
        %400 = vmatprep.subr.mxu0 0.0
        %401 = vmatpush2.xpose.msra.mxu0 0.0
        %402 = vmatprep.subr.mxu0 0.0
        %403 = vmatpush2.xpose.msra.mxu0 0.0
        %404 = vmatprep.subr.mxu0 0.0
        %405 = vmatpush2.xpose.msra.mxu0 0.0
        %406 = vmatprep.subr.mxu0 0.0
        %407 = vmatpush2.xpose.msra.mxu0 0.0
        %408 = vmatprep.subr.mxu0 0.0
        %409 = vmatpush2.xpose.msra.mxu0 0.0
        %410 = vmatprep.subr.mxu0 0.0
        %411 = vmatpush2.xpose.msra.mxu0 0.0
        %412 = vmatprep.subr.mxu0 0.0
        %413 = vmatpush2.xpose.msra.mxu0 0.0
        %414 = vmatprep.subr.mxu0 0.0
        %415 = vmatpush2.xpose.msra.mxu0 0.0
        %416 = vmatprep.subr.mxu0 0.0
        %417 = vmatpush2.xpose.msra.mxu0 0.0
        %418 = vmatprep.subr.mxu0 0.0
        %419 = vmatpush2.xpose.msra.mxu0 0.0
        %420 = vmatprep.subr.mxu0 0.0
        %421 = vmatpush2.xpose.msra.mxu0 0.0
        %422 = vmatprep.subr.mxu0 0.0
        %423 = vmatpush2.xpose.msra.mxu0 0.0
        %424 = vmatprep.subr.mxu0 0.0
        %425 = vmatpush2.xpose.msra.mxu0 0.0
        %426 = vmatprep.subr.mxu0 0.0
        %427 = vmatpush2.xpose.msra.mxu0 0.0
        %428 = vmatprep.subr.mxu0 0.0
        %429 = vmatpush2.xpose.msra.mxu0 0.0
        %430 = vmatprep.subr.mxu0 0.0
        %431 = vmatpush2.xpose.msra.mxu0 0.0
        %432 = vmatprep.mubr.f32.mxu0 0.0
        %433 = vmatmul.mubr.f32.gmra.mxu0 %v364
        %v434 = vpop.f32.mrf.mxu0
        %v435 = vadd.f32 0.0, %v434
        %v436 = vpop.f32.mrf.mxu0
        %437 = vdwg.mxu0
        %v438 = vmul.f32 %v435, 0.25
        %v439 = vld [vmem:[#allocation8] sm:$0xff]
        %v440 = vadd.f32 %v438, %v439
        %vm441 = vcmask 64512
        %v442 = vsel %vm441, %v440, -inf
        %443 = vmax.xlane.f32.xlu0 %v442
        %v444 = vpop.xlane.xlu0 %443
        %v445 = vsub.f32 %v440, %v444
        %v446 = vmul.f32 %v445, 1.442695
        %v447 = vpow.pop %v446
        %v448 = vsel %vm441, %v447, 0.0
        %449 = vadd.xlane.f32.xlu0 %v448
        %v450 = vpop.xlane.xlu0 %449
        %v451 = vrcp.pop %v450
        %v452 = vmul.f32 %v447, %v451
        %453 = vrot.lane.b32.xlu0 %v357, 96
        %v454 = vpop.permute.xlu0 %453
        %v457 = vsel %vm441, %v452, 0
        %459 = vmatprep.subr.mxu0 0.0
        %460 = vmatpush1.msra.mxu0 0.0
        %461 = vmatprep.subr.mxu0 0.0
        %462 = vmatpush1.msra.mxu0 0.0
        %463 = vmatprep.subr.mxu0 0.0
        %464 = vmatpush1.msra.mxu0 0.0
        %465 = vmatprep.subr.mxu0 0.0
        %466 = vmatpush1.msra.mxu0 0.0
        %467 = vmatprep.subr.mxu0 0.0
        %468 = vmatpush1.msra.mxu0 0.0
        %469 = vmatprep.subr.mxu0 0.0
        %470 = vmatpush1.msra.mxu0 0.0
        %471 = vmatprep.subr.mxu0 0.0
        %472 = vmatpush1.msra.mxu0 0.0
        %473 = vmatprep.subr.mxu0 0.0
        %474 = vmatpush1.msra.mxu0 0.0
        %475 = vmatprep.subr.mxu0 0.0
        %476 = vmatpush1.msra.mxu0 0.0
        %477 = vmatprep.subr.mxu0 0.0
        %478 = vmatpush1.msra.mxu0 0.0
        %479 = vmatprep.subr.mxu0 0.0
        %480 = vmatpush1.msra.mxu0 0.0
        %481 = vmatprep.subr.mxu0 0.0
        %482 = vmatpush1.msra.mxu0 0.0
        %483 = vmatprep.subr.mxu0 0.0
        %484 = vmatpush1.msra.mxu0 0.0
        %485 = vmatprep.subr.mxu0 0.0
        %486 = vmatpush1.msra.mxu0 0.0
        %487 = vmatprep.subr.mxu0 0.0
        %488 = vmatpush1.msra.mxu0 0.0
        %489 = vmatprep.subr.mxu0 0.0
        %490 = vmatpush1.msra.mxu0 %v454
        %491 = vmatprep.subr.mxu0 0.0
        %492 = vmatpush2.msra.mxu0 0.0
        %493 = vmatprep.subr.mxu0 0.0
        %494 = vmatpush2.msra.mxu0 0.0
        %495 = vmatprep.subr.mxu0 0.0
        %496 = vmatpush2.msra.mxu0 0.0
        %497 = vmatprep.subr.mxu0 0.0
        %498 = vmatpush2.msra.mxu0 0.0
        %499 = vmatprep.subr.mxu0 0.0
        %500 = vmatpush2.msra.mxu0 0.0
        %501 = vmatprep.subr.mxu0 0.0
        %502 = vmatpush2.msra.mxu0 0.0
        %503 = vmatprep.subr.mxu0 0.0
        %504 = vmatpush2.msra.mxu0 0.0
        %505 = vmatprep.subr.mxu0 0.0
        %506 = vmatpush2.msra.mxu0 0.0
        %507 = vmatprep.subr.mxu0 0.0
        %508 = vmatpush2.msra.mxu0 0.0
        %509 = vmatprep.subr.mxu0 0.0
        %510 = vmatpush2.msra.mxu0 0.0
        %511 = vmatprep.subr.mxu0 0.0
        %512 = vmatpush2.msra.mxu0 0.0
        %513 = vmatprep.subr.mxu0 0.0
        %514 = vmatpush2.msra.mxu0 0.0
        %515 = vmatprep.subr.mxu0 0.0
        %516 = vmatpush2.msra.mxu0 0.0
        %517 = vmatprep.subr.mxu0 0.0
        %518 = vmatpush2.msra.mxu0 0.0
        %519 = vmatprep.subr.mxu0 0.0
        %520 = vmatpush2.msra.mxu0 0.0
        %521 = vmatprep.subr.mxu0 0.0
        %522 = vmatpush2.msra.mxu0 0.0
        %523 = vmatprep.mubr.f32.mxu0 0.0
        %524 = vmatmul.mubr.f32.gmra.mxu0 %v457
        %v525 = vpop.f32.mrf.mxu0
        %v526 = vadd.f32 0.0, %v525
        %v527 = vpop.f32.mrf.mxu0
        %528 = vdwg.mxu0
        %v529 = vld [vmem:[#allocation7] sm:$0xff]
        %v530 = vld [vmem:[#allocation7 + $0x8] sm:$0xff]
        %v531 = vld [vmem:[%s3] sm:$0x1]
        %v533 = vlaneseq
        %v534 = vshrl.u32 %v533, 7
        %v535 = vsub.s32 0, %v534
        %v536 = vrot.slane %v531, %v535
        %v539 = vsel %vm363, %v526, 0
        %541 = vmatprep.subr.mxu0 0.0
        %542 = vmatpush1.msra.mxu0 0.0
        %543 = vmatprep.subr.mxu0 0.0
        %544 = vmatpush1.msra.mxu0 0.0
        %545 = vmatprep.subr.mxu0 0.0
        %546 = vmatpush1.msra.mxu0 0.0
        %547 = vmatprep.subr.mxu0 0.0
        %548 = vmatpush1.msra.mxu0 0.0
        %549 = vmatprep.subr.mxu0 0.0
        %550 = vmatpush1.msra.mxu0 0.0
        %551 = vmatprep.subr.mxu0 0.0
        %552 = vmatpush1.msra.mxu0 0.0
        %553 = vmatprep.subr.mxu0 0.0
        %554 = vmatpush1.msra.mxu0 0.0
        %555 = vmatprep.subr.mxu0 0.0
        %556 = vmatpush1.msra.mxu0 0.0
        %557 = vmatprep.subr.mxu0 0.0
        %558 = vmatpush1.msra.mxu0 0.0
        %559 = vmatprep.subr.mxu0 0.0
        %560 = vmatpush1.msra.mxu0 0.0
        %561 = vmatprep.subr.mxu0 0.0
        %562 = vmatpush1.msra.mxu0 0.0
        %563 = vmatprep.subr.mxu0 0.0
        %564 = vmatpush1.msra.mxu0 0.0
        %565 = vmatprep.subr.mxu0 0.0
        %566 = vmatpush1.msra.mxu0 0.0
        %567 = vmatprep.subr.mxu0 0.0
        %568 = vmatpush1.msra.mxu0 0.0
        %569 = vmatprep.subr.mxu0 0.0
        %570 = vmatpush1.msra.mxu0 %v530
        %571 = vmatprep.subr.mxu0 0.0
        %572 = vmatpush1.msra.mxu0 %v529
        %573 = vmatprep.subr.mxu0 0.0
        %574 = vmatpush2.msra.mxu0 0.0
        %575 = vmatprep.subr.mxu0 0.0
        %576 = vmatpush2.msra.mxu0 0.0
        %577 = vmatprep.subr.mxu0 0.0
        %578 = vmatpush2.msra.mxu0 0.0
        %579 = vmatprep.subr.mxu0 0.0
        %580 = vmatpush2.msra.mxu0 0.0
        %581 = vmatprep.subr.mxu0 0.0
        %582 = vmatpush2.msra.mxu0 0.0
        %583 = vmatprep.subr.mxu0 0.0
        %584 = vmatpush2.msra.mxu0 0.0
        %585 = vmatprep.subr.mxu0 0.0
        %586 = vmatpush2.msra.mxu0 0.0
        %587 = vmatprep.subr.mxu0 0.0
        %588 = vmatpush2.msra.mxu0 0.0
        %589 = vmatprep.subr.mxu0 0.0
        %590 = vmatpush2.msra.mxu0 0.0
        %591 = vmatprep.subr.mxu0 0.0
        %592 = vmatpush2.msra.mxu0 0.0
        %593 = vmatprep.subr.mxu0 0.0
        %594 = vmatpush2.msra.mxu0 0.0
        %595 = vmatprep.subr.mxu0 0.0
        %596 = vmatpush2.msra.mxu0 0.0
        %597 = vmatprep.subr.mxu0 0.0
        %598 = vmatpush2.msra.mxu0 0.0
        %599 = vmatprep.subr.mxu0 0.0
        %600 = vmatpush2.msra.mxu0 0.0
        %601 = vmatprep.subr.mxu0 0.0
        %602 = vmatpush2.msra.mxu0 0.0
        %603 = vmatprep.subr.mxu0 0.0
        %604 = vmatpush2.msra.mxu0 0.0
        %605 = vmatprep.mubr.f32.mxu0 0.0
        %606 = vmatmul.mubr.f32.gmra.mxu0 %v539
        %v607 = vpop.f32.mrf.mxu0
        %v608 = vadd.f32 %v536, %v607
        %v609 = vpop.f32.mrf.mxu0
        %610 = vdwg.mxu0
        %611 = vst [vmem:[%s281] sm:$0xff] %v608
        %s612 = sand.u32 %s142, 1
        %s613 = scalar_lea.sflag [#allocation4], %s612
        %s614 = sand.u32 %s142, 1
        %s615 = smul.addr %s614, 8
        %s616 = scalar_lea.vmem [#allocation10], %s615
        // Predicated region
        $region57: #{tpu_custom_call.1} parent=39 // pred_check
          %p617 = pneg %p152
        $region58: #{tpu_custom_call.1} parent=39 // pred_check_branch
          %619 = sbr.rel (%p617) target = $region60
        $region59: #{tpu_custom_call.1} parent=39 // pred_region
          %s621 = ssub.s32 128, 128
          %622 = vsyncadd %s613, %s621
          %s623 = smul.addr %s24, 128
          %s624 = scalar_lea.hbm %s5, %s623
          %s626 = sshll.u32 %s616, 4
          %s627 = int_to_ptr.vmem [resolvable:$true] %s626
          %629 = dma.vmem_to_hbm [thread:$0]  %s627, 128, %s624, %s613
        $region60: #{tpu_custom_call.1} parent=39 // pred_fallthru
          _
      $region40: #{tpu_custom_call.1} parent=5 // pred_fallthru
        _
      %p630 = scmp.le.s32.totalorder 2, %s19
      // Predicated region
      $region61: #{tpu_custom_call.1} parent=5 // pred_check
        %p631 = pneg %p630
      $region62: #{tpu_custom_call.1} parent=5 // pred_check_branch
        %633 = sbr.rel (%p631) target = $region64
      $region63: #{tpu_custom_call.1} parent=5 // pred_region
        %s634 = ssub.s32 %s19, 2
        // Predicated region
        $region65: #{tpu_custom_call.1} parent=63 // pred_check
          %p635 = pneg %p158
        $region66: #{tpu_custom_call.1} parent=63 // pred_check_branch
          %637 = sbr.rel (%p635) target = $region68
        $region67: #{tpu_custom_call.1} parent=63 // pred_region
          %s638 = sand.u32 %s143, 1
          %s639 = scalar_lea.sflag [#allocation4], %s638
          %s640 = sand.u32 %s143, 1
          %s641 = smul.addr %s640, 8
          %s642 = scalar_lea.vmem [#allocation10], %s641
          %643 = dma.done %s639, 128
        $region68: #{tpu_custom_call.1} parent=63 // pred_fallthru
          _
      $region64: #{tpu_custom_call.1} parent=5 // pred_fallthru
        _
    $region6: #{tpu_custom_call.1} parent=1 // loop_footer
      %s23 = sadd.s32 1, %s19
    $region7: #{tpu_custom_call.1} parent=1 // loop_footer_branch
      %18 = sbr.rel target = $region3
    $region8: #{tpu_custom_call.1} parent=1 // loop_exit
      _
    %644 = vsyncpa [#allocation3], 1
    %s645 = scalar_lea.sflag [#allocation3], 1
    %646 = vsyncpa %s645, 1
    %647 = vsyncpa [#allocation6], 1
    %648 = vsyncpa [#allocation9], 1
    %649 = vsyncpa [#allocation4], 1
    %s650 = scalar_lea.sflag [#allocation4], 1
    %651 = vsyncpa %s650, 1

</llo_original>
